<compile_context>
chip_gen: v7x
topology: tpu7x:2x2x1
jax: 0.10.0
libtpu: 0.0.40
codegen_flags: <defaults>
</compile_context>

<pallas_src>
import functools

import jax
import jax.numpy as jnp
from jax.experimental import pallas as pl
from jax.experimental.pallas import tpu as pltpu


def _round_up(n, m):
    return ((n + m - 1) // m) * m


def _dropout_keep_mask(seed_u32, tile_idx_u32, shape, tile_m, width, thr):
    """Counter-based keep mask: murmur3 fmix32 over global element indices."""
    rows = jax.lax.broadcasted_iota(jnp.uint32, shape, 0)
    cols = jax.lax.broadcasted_iota(jnp.uint32, shape, 1)
    gidx = (tile_idx_u32 * jnp.uint32(tile_m) + rows) * jnp.uint32(width) + cols
    x = gidx ^ (seed_u32 * jnp.uint32(0x9E3779B9))
    x = x ^ (x >> 16)
    x = x * jnp.uint32(0x85EBCA6B)
    x = x ^ (x >> 13)
    x = x * jnp.uint32(0xC2B2AE35)
    x = x ^ (x >> 16)
    return x >= thr                                   # P(keep) = 1 - p


def _mlp_kernel(seed_ref, x_ref, w1_ref, b1_ref, w2_ref, b2_ref, o_ref,
                *, dropout_prob, training, tile_m, h_pad):
    # ---- hidden = relu(x @ W1 + b1); f32 accumulation on the MXU ----------
    h = jnp.dot(x_ref[...], w1_ref[...], preferred_element_type=jnp.float32)
    h = jnp.maximum(h + b1_ref[...], 0.0)      # bias read once, single broadcast

    # ---- dropout (training only; eval is identity, matching nn.Dropout) ---
    if training and dropout_prob > 0.0:
        if dropout_prob >= 1.0:
            # p == 1.0: drop everything (avoid uint32 threshold overflow).
            h = jnp.zeros_like(h)
        else:
            # TODO(synk): counter-based hash RNG, not torch's RNG stream.
            seed_u32 = seed_ref[0].astype(jnp.uint32)
            tile_u32 = pl.program_id(0).astype(jnp.uint32)
            thr = jnp.uint32(int(dropout_prob * (2 ** 32)))
            keep = _dropout_keep_mask(seed_u32, tile_u32, h.shape,
                                      tile_m, h_pad, thr)
            h = jnp.where(keep, h * (1.0 / (1.0 - dropout_prob)), 0.0)

    # ---- out = hidden @ W2 + b2 --------------------------------------------
    # Cast hidden to the weight dtype (no-op for f32, bf16 MXU path otherwise).
    o = jnp.dot(h.astype(w2_ref.dtype), w2_ref[...],
                preferred_element_type=jnp.float32)
    o_ref[...] = (o + b2_ref[...]).astype(o_ref.dtype)


def mlp_forward(x, w1_t, b1, w2_t, b2, *, dropout_prob=0.5, training=False,
                seed=0, compute_dtype=jnp.float32):
    """x: (B, ...) -> flattened (B, num_inputs). Returns (B, num_outputs) f32."""
    batch = x.shape[0]
    x2d = x.reshape(batch, -1).astype(jnp.float32)   # == X.reshape(X.size(0), -1)
    num_inputs = x2d.shape[1]
    num_hidden = w1_t.shape[1]
    num_outputs = w2_t.shape[1]

    # ---- pad to TPU-friendly granularities ---------------------------------
    tile_m = min(128, _round_up(batch, 8))           # >= 1 sublane group, <= 128
    m_pad = _round_up(batch, tile_m)
    in_pad = _round_up(num_inputs, 128)
    h_pad = _round_up(num_hidden, 128)
    n_pad = _round_up(num_outputs, 128)

    x_p = jnp.pad(x2d, ((0, m_pad - batch), (0, in_pad - num_inputs)))
    w1_p = jnp.pad(w1_t, ((0, in_pad - num_inputs), (0, h_pad - num_hidden)))
    b1_p = jnp.pad(b1.reshape(1, -1), ((0, 0), (0, h_pad - num_hidden)))
    w2_p = jnp.pad(w2_t, ((0, h_pad - num_hidden), (0, n_pad - num_outputs)))
    b2_p = jnp.pad(b2.reshape(1, -1), ((0, 0), (0, n_pad - num_outputs)))

    # bf16 operands on v6e/v7x halve HBM->VMEM weight bytes; biases + epilogue
    # stay f32 and accumulation is always f32 (preferred_element_type).
    x_p = x_p.astype(compute_dtype)
    w1_p = w1_p.astype(compute_dtype)
    w2_p = w2_p.astype(compute_dtype)
    b1_p = b1_p.astype(jnp.float32)
    b2_p = b2_p.astype(jnp.float32)

    grid_m = m_pad // tile_m
    seed_arr = jnp.asarray([seed], dtype=jnp.int32)
    kernel = functools.partial(
        _mlp_kernel, dropout_prob=float(dropout_prob), training=bool(training),
        tile_m=tile_m, h_pad=h_pad)

    itemsize = jnp.dtype(compute_dtype).itemsize
    cost = pl.CostEstimate(
        flops=2 * m_pad * (in_pad * h_pad + h_pad * n_pad),
        transcendentals=0,
        bytes_accessed=int((x_p.size + w1_p.size + w2_p.size) * itemsize
                           + (b1_p.size + b2_p.size + m_pad * n_pad) * 4),
    )

    out_padded = pl.pallas_call(
        kernel,
        out_shape=jax.ShapeDtypeStruct((m_pad, n_pad), jnp.float32),
        grid_spec=pltpu.PrefetchScalarGridSpec(
            num_scalar_prefetch=1,                 # dropout seed lives in SMEM
            grid=(grid_m,),
            in_specs=[
                # activations: one (tile_m, in_pad) row block per grid step
                pl.BlockSpec((tile_m, in_pad), lambda i, seed: (i, 0)),
                # weights / biases: pinned -> VMEM-resident across all steps
                pl.BlockSpec((in_pad, h_pad), lambda i, seed: (0, 0)),
                pl.BlockSpec((1, h_pad), lambda i, seed: (0, 0)),
                pl.BlockSpec((h_pad, n_pad), lambda i, seed: (0, 0)),
                pl.BlockSpec((1, n_pad), lambda i, seed: (0, 0)),
            ],
            out_specs=pl.BlockSpec((tile_m, n_pad), lambda i, seed: (i, 0)),
        ),
        compiler_params=pltpu.CompilerParams(
            dimension_semantics=("parallel",),
        ),
        cost_estimate=cost,
    )(seed_arr, x_p, w1_p, b1_p, w2_p, b2_p)

    return out_padded[:batch, :num_outputs]


def init_mlp_params(key, num_inputs, num_hidden, num_outputs):
    """Xavier-uniform weights (as in _initialize_weights), zero biases."""
    k1, k2 = jax.random.split(key)

    def xavier_uniform(k, fan_out, fan_in):
        a = jnp.sqrt(6.0 / (fan_in + fan_out))
        # PyTorch stores Linear weight as (out, in); keep the transposed
        # (in, out) copy for the kernel's row-major matmul.
        w = jax.random.uniform(k, (fan_out, fan_in), jnp.float32, -a, a)
        return w.T

    w1_t = xavier_uniform(k1, num_hidden, num_inputs)      # (num_inputs, num_hidden)
    b1 = jnp.zeros((1, num_hidden), jnp.float32)
    w2_t = xavier_uniform(k2, num_outputs, num_hidden)     # (num_hidden, num_outputs)
    b2 = jnp.zeros((1, num_outputs), jnp.float32)
    return w1_t, b1, w2_t, b2


if __name__ == "__main__":
    # Small shapes consistent with the module: X is NCHW and gets flattened.
    batch, C, H, W = 2, 4, 16, 16
    num_inputs = C * H * W          # 1024
    num_hidden = 32
    num_outputs = 10

    key = jax.random.PRNGKey(0)
    kx, kp = jax.random.split(key)
    x = jax.random.normal(kx, (batch, C, H, W), jnp.float32)
    w1_t, b1, w2_t, b2 = init_mlp_params(kp, num_inputs, num_hidden, num_outputs)
    x2d = x.reshape(batch, -1)

    # 1) f32 eval-mode forward (dropout is identity, matching nn.Dropout.eval()).
    out = mlp_forward(x, w1_t, b1, w2_t, b2, dropout_prob=0.5, training=False)
    out = jax.block_until_ready(out)
    ref = jnp.maximum(x2d @ w1_t + b1, 0.0) @ w2_t + b2
    assert out.shape == (batch, num_outputs)
    assert jnp.allclose(out, ref, atol=1e-5, rtol=1e-5)

    # 2) bf16-operand path (halves weight DMA on v6e/v7x; f32 accumulation).
    out_bf = mlp_forward(x, w1_t, b1, w2_t, b2, dropout_prob=0.5,
                         training=False, compute_dtype=jnp.bfloat16)
    out_bf = jax.block_until_ready(out_bf)
    q = lambda a: a.astype(jnp.bfloat16).astype(jnp.float32)
    h_ref = jnp.maximum(q(x2d) @ q(w1_t) + b1, 0.0)
    ref_bf = q(h_ref) @ q(w2_t) + b2
    assert jnp.allclose(out_bf, ref_bf, atol=2e-2, rtol=2e-2)

    # 3) training-mode forward exercises the in-kernel dropout path.
    out_tr = mlp_forward(x, w1_t, b1, w2_t, b2, dropout_prob=0.5,
                         training=True, seed=123)
    out_tr = jax.block_until_ready(out_tr)
    assert out_tr.shape == (batch, num_outputs)
    assert bool(jnp.all(jnp.isfinite(out_tr)))
    assert not bool(jnp.allclose(out_tr, out, atol=1e-6, rtol=0.0))

    print("KERNEL_OK")
</pallas_src>

<mosaic_0001>
module attributes {stable_mosaic.version = 11 : i64} {
  func.func @_mlp_kernel(%arg0: i32, %arg1: memref<1xi32, #tpu.memory_space<smem>>, %arg2: memref<8x1024xf32, #tpu.memory_space<vmem>>, %arg3: memref<1024x128xf32, #tpu.memory_space<vmem>>, %arg4: memref<1x128xf32, #tpu.memory_space<vmem>>, %arg5: memref<128x128xf32, #tpu.memory_space<vmem>>, %arg6: memref<1x128xf32, #tpu.memory_space<vmem>>, %arg7: memref<8x128xf32, #tpu.memory_space<vmem>>) attributes {dimension_semantics = [#tpu.dimension_semantics<parallel>], iteration_bounds = array<i64: 1>, scalar_prefetch = 1 : i64, scratch_operands = 0 : i64, tpu.core_type = #tpu.core_type<tc>, window_params = [{transform_indices = @transform_0, window_bounds = array<i64: 8, 1024>}, {pipeline_mode = #tpu.pipeline_mode<synchronous>, transform_indices = @transform_1, window_bounds = array<i64: 1024, 128>}, {pipeline_mode = #tpu.pipeline_mode<synchronous>, transform_indices = @transform_2, window_bounds = array<i64: 1, 128>}, {pipeline_mode = #tpu.pipeline_mode<synchronous>, transform_indices = @transform_3, window_bounds = array<i64: 128, 128>}, {pipeline_mode = #tpu.pipeline_mode<synchronous>, transform_indices = @transform_4, window_bounds = array<i64: 1, 128>}, {transform_indices = @transform_5, window_bounds = array<i64: 8, 128>}]} {
    %c0 = arith.constant 0 : index
    %c0_0 = arith.constant 0 : index
    %0 = vector.load %arg2[%c0, %c0_0] : memref<8x1024xf32, #tpu.memory_space<vmem>>, vector<8x1024xf32>
    %c0_1 = arith.constant 0 : index
    %c0_2 = arith.constant 0 : index
    %1 = vector.load %arg3[%c0_1, %c0_2] : memref<1024x128xf32, #tpu.memory_space<vmem>>, vector<1024x128xf32>
    %cst = arith.constant dense<0.000000e+00> : vector<8x128xf32>
    %2 = tpu.matmul %0, %1, %cst {dimension_numbers = #tpu.dot_dimension_numbers<[1], [0], [0], [1], [0, 0, 1, 1], [], []>} : vector<8x1024xf32>, vector<1024x128xf32>, vector<8x128xf32> -> vector<8x128xf32>
    %c0_3 = arith.constant 0 : index
    %c0_4 = arith.constant 0 : index
    %3 = vector.load %arg4[%c0_3, %c0_4] : memref<1x128xf32, #tpu.memory_space<vmem>>, vector<1x128xf32>
    %4 = vector.broadcast %3 : vector<1x128xf32> to vector<8x128xf32>
    %5 = arith.addf %2, %4 : vector<8x128xf32>
    %cst_5 = arith.constant 0.000000e+00 : f32
    %6 = vector.broadcast %cst_5 : f32 to vector<8x128xf32>
    %7 = arith.maximumf %5, %6 : vector<8x128xf32>
    %c0_6 = arith.constant 0 : index
    %c0_7 = arith.constant 0 : index
    %8 = vector.load %arg5[%c0_6, %c0_7] : memref<128x128xf32, #tpu.memory_space<vmem>>, vector<128x128xf32>
    %cst_8 = arith.constant dense<0.000000e+00> : vector<8x128xf32>
    %9 = tpu.matmul %7, %8, %cst_8 {dimension_numbers = #tpu.dot_dimension_numbers<[1], [0], [0], [1], [0, 0, 1, 1], [], []>} : vector<8x128xf32>, vector<128x128xf32>, vector<8x128xf32> -> vector<8x128xf32>
    %c0_9 = arith.constant 0 : index
    %c0_10 = arith.constant 0 : index
    %10 = vector.load %arg6[%c0_9, %c0_10] : memref<1x128xf32, #tpu.memory_space<vmem>>, vector<1x128xf32>
    %11 = vector.broadcast %10 : vector<1x128xf32> to vector<8x128xf32>
    %12 = arith.addf %9, %11 : vector<8x128xf32>
    %c0_11 = arith.constant 0 : index
    %c0_12 = arith.constant 0 : index
    %13 = vector.load %arg7[%c0_11, %c0_12] : memref<8x128xf32, #tpu.memory_space<vmem>>, vector<8x128xf32>
    tpu.vector_store %arg7[%c0_11, %c0_12], %12 {strides = array<i32>} : memref<8x128xf32, #tpu.memory_space<vmem>>, vector<8x128xf32>,
    return
  }
  func.func @transform_0(%arg0: i32, %arg1: memref<1xi32, #tpu.memory_space<smem>>) -> (i32, i32) {
    %c0_i32 = arith.constant 0 : i32
    %c0_i32_0 = arith.constant 0 : i32
    return %arg0, %c0_i32 : i32, i32
  }
  func.func @transform_1(%arg0: i32, %arg1: memref<1xi32, #tpu.memory_space<smem>>) -> (i32, i32) {
    %c0_i32 = arith.constant 0 : i32
    %c0_i32_0 = arith.constant 0 : i32
    %c0_i32_1 = arith.constant 0 : i32
    return %c0_i32, %c0_i32_0 : i32, i32
  }
  func.func @transform_2(%arg0: i32, %arg1: memref<1xi32, #tpu.memory_space<smem>>) -> (i32, i32) {
    %c0_i32 = arith.constant 0 : i32
    %c0_i32_0 = arith.constant 0 : i32
    %c0_i32_1 = arith.constant 0 : i32
    return %c0_i32, %c0_i32_0 : i32, i32
  }
  func.func @transform_3(%arg0: i32, %arg1: memref<1xi32, #tpu.memory_space<smem>>) -> (i32, i32) {
    %c0_i32 = arith.constant 0 : i32
    %c0_i32_0 = arith.constant 0 : i32
    %c0_i32_1 = arith.constant 0 : i32
    return %c0_i32, %c0_i32_0 : i32, i32
  }
  func.func @transform_4(%arg0: i32, %arg1: memref<1xi32, #tpu.memory_space<smem>>) -> (i32, i32) {
    %c0_i32 = arith.constant 0 : i32
    %c0_i32_0 = arith.constant 0 : i32
    %c0_i32_1 = arith.constant 0 : i32
    return %c0_i32, %c0_i32_0 : i32, i32
  }
  func.func @transform_5(%arg0: i32, %arg1: memref<1xi32, #tpu.memory_space<smem>>) -> (i32, i32) {
    %c0_i32 = arith.constant 0 : i32
    %c0_i32_0 = arith.constant 0 : i32
    return %arg0, %c0_i32 : i32, i32
  }
}

</mosaic_0001>

<llo_original>
// kernel: tpu_custom_call.1
$region0: #{tpu_custom_call.1}
  #allocation0 [shape = 'u32[]', space=smem, size = 0x4, offset = 0x4, fixed_abs, tag = 'smem constant byte address 0x4 - core index']
  #allocation1 [shape = 'u32[144,128]{1,0:T(1,128)}', space=vmem, size = 0x12000, scoped, tag = 'internal scratch']
  #allocation2 [shape = 's32[1]{0}', space=sflag, size = 0x4, scoped, tag = 'scoped memory for tpu_custom_call.1']
  #allocation3 [shape = 's32[1]{0:T(128)S(6)}', space=smem, size = 0x200, scoped, tag = 'prefetched SMEM operand 0']
  %s0 = inlined_call_operand.<no memory space> [shape: s32[1], index: 0, kind: input, shape index: {}]
  %s1 = inlined_call_operand.hbm [shape: f32[8,1024], index: 1, kind: input, shape index: {}]
  %s2 = inlined_call_operand.hbm [shape: f32[1024,128], index: 2, kind: input, shape index: {}]
  %s3 = inlined_call_operand.vmem [shape: f32[1,128], index: 3, kind: input, shape index: {}]
  %s4 = inlined_call_operand.hbm [shape: f32[128,128], index: 4, kind: input, shape index: {}]
  %s5 = inlined_call_operand.vmem [shape: f32[1,128], index: 5, kind: input, shape index: {}]
  %s6 = inlined_call_operand.hbm [shape: f32[8,128], index: 6, kind: output, shape index: {}]
  %s7 = sld [smem:[#allocation0]]
  $region42: #{tpu_custom_call.1} parent=0
    _
  %s9 = ssub.s32 1, %s7
  %s10 = scalar_select 0, %s9, %s7
  %11 = sst [smem:[#allocation3]] %s0
  $region1: #{tpu_custom_call.1} parent=0
    #allocation4 [shape = 'u8[32768]{0}', space=vmem, size = 0x8000, scoped, tag = 'input window, operand 1, single buffered']
    #allocation5 [shape = 's32[1]{0}', space=sflag, size = 0x4, scoped, tag = 'scoped memory for tpu_custom_call.1']
    #allocation6 [shape = 's32[1]{0}', space=sflag, size = 0x4, scoped, tag = 'scoped memory for tpu_custom_call.1']
    #allocation7 [shape = 'u8[524288]{0}', space=vmem, size = 0x80000, scoped, tag = 'input window, operand 2, single buffered']
    #allocation8 [shape = 's32[1]{0}', space=sflag, size = 0x4, scoped, tag = 'scoped memory for tpu_custom_call.1']
    #allocation9 [shape = 'u8[65536]{0}', space=vmem, size = 0x10000, scoped, tag = 'input window, operand 4, single buffered']
    #allocation10 [shape = 'u8[4096]{0}', space=vmem, size = 0x1000, scoped, tag = 'output window, operand 0, single buffered']
    %12 = vsyncpa [#allocation5], 0
    %13 = vsyncpa [#allocation8], 0
    %14 = vsyncpa [#allocation6], 0
    // Predicated region
    $region2: #{tpu_custom_call.1} parent=1 // pred_check
      _
    $region3: #{tpu_custom_call.1} parent=1 // pred_check_branch
      %16 = sbr.rel (0) target = $region5
    $region4: #{tpu_custom_call.1} parent=1 // pred_region
      %s18 = ssub.s32 1024, 1024
      %19 = vsyncadd [#allocation5], %s18
      %s21 = sshll.u32 [#allocation4], 4
      %s22 = int_to_ptr.vmem [resolvable:$true] %s21
      %24 = dma.hbm_to_vmem [thread:$0]  %s1, 1024, %s22, [#allocation5]
    $region5: #{tpu_custom_call.1} parent=1 // pred_fallthru
      _
    // Predicated region
    $region6: #{tpu_custom_call.1} parent=1 // pred_check
      _
    $region7: #{tpu_custom_call.1} parent=1 // pred_check_branch
      %26 = sbr.rel (0) target = $region9
    $region8: #{tpu_custom_call.1} parent=1 // pred_region
      %s28 = ssub.s32 16384, 16384
      %29 = vsyncadd [#allocation8], %s28
      %s30 = sshll.u32 [#allocation7], 4
      %s31 = int_to_ptr.vmem [resolvable:$true] %s30
      %36 = dma.hbm_to_vmem [thread:$0]  %s2, 16384, %s31, [#allocation8], 128, 128, 8
    $region9: #{tpu_custom_call.1} parent=1 // pred_fallthru
      _
    // Predicated region
    $region10: #{tpu_custom_call.1} parent=1 // pred_check
      _
    $region11: #{tpu_custom_call.1} parent=1 // pred_check_branch
      %38 = sbr.rel (0) target = $region13
    $region12: #{tpu_custom_call.1} parent=1 // pred_region
      _
    $region13: #{tpu_custom_call.1} parent=1 // pred_fallthru
      _
    // Predicated region
    $region14: #{tpu_custom_call.1} parent=1 // pred_check
      _
    $region15: #{tpu_custom_call.1} parent=1 // pred_check_branch
      %40 = sbr.rel (0) target = $region17
    $region16: #{tpu_custom_call.1} parent=1 // pred_region
      %s42 = ssub.s32 2048, 2048
      %43 = vsyncadd [#allocation8], %s42
      %s44 = sshll.u32 [#allocation9], 4
      %s45 = int_to_ptr.vmem [resolvable:$true] %s44
      %50 = dma.hbm_to_vmem [thread:$0]  %s4, 2048, %s45, [#allocation8], 128, 128, 8
    $region17: #{tpu_custom_call.1} parent=1 // pred_fallthru
      _
    // Predicated region
    $region18: #{tpu_custom_call.1} parent=1 // pred_check
      _
    $region19: #{tpu_custom_call.1} parent=1 // pred_check_branch
      %52 = sbr.rel (0) target = $region21
    $region20: #{tpu_custom_call.1} parent=1 // pred_region
      _
    $region21: #{tpu_custom_call.1} parent=1 // pred_fallthru
      _
    // Predicated region
    $region22: #{tpu_custom_call.1} parent=1 // pred_check
      _
    $region23: #{tpu_custom_call.1} parent=1 // pred_check_branch
      %54 = sbr.rel (0) target = $region25
    $region24: #{tpu_custom_call.1} parent=1 // pred_region
      %55 = dma.done [#allocation5], 1024
    $region25: #{tpu_custom_call.1} parent=1 // pred_fallthru
      _
    // Predicated region
    $region26: #{tpu_custom_call.1} parent=1 // pred_check
      _
    $region27: #{tpu_custom_call.1} parent=1 // pred_check_branch
      %57 = sbr.rel (0) target = $region29
    $region28: #{tpu_custom_call.1} parent=1 // pred_region
      %58 = dma.done [#allocation8], 16384
    $region29: #{tpu_custom_call.1} parent=1 // pred_fallthru
      _
    // Predicated region
    $region30: #{tpu_custom_call.1} parent=1 // pred_check
      _
    $region31: #{tpu_custom_call.1} parent=1 // pred_check_branch
      %60 = sbr.rel (0) target = $region33
    $region32: #{tpu_custom_call.1} parent=1 // pred_region
      %61 = dma.done [#allocation8], 2048
    $region33: #{tpu_custom_call.1} parent=1 // pred_fallthru
      _
    %v62 = vld [vmem:[#allocation4] sm:$0xff]
    %v63 = vld [vmem:[#allocation4 + $0x8] sm:$0xff]
    %v64 = vld [vmem:[#allocation4 + $0x10] sm:$0xff]
    %v65 = vld [vmem:[#allocation4 + $0x18] sm:$0xff]
    %v66 = vld [vmem:[#allocation4 + $0x20] sm:$0xff]
    %v67 = vld [vmem:[#allocation4 + $0x28] sm:$0xff]
    %v68 = vld [vmem:[#allocation4 + $0x30] sm:$0xff]
    %v69 = vld [vmem:[#allocation4 + $0x38] sm:$0xff]
    %v70 = vld [vmem:[#allocation7] sm:$0xff]
    %v71 = vld [vmem:[#allocation7 + $0x8] sm:$0xff]
    %v72 = vld [vmem:[#allocation7 + $0x10] sm:$0xff]
    %v73 = vld [vmem:[#allocation7 + $0x18] sm:$0xff]
    %v74 = vld [vmem:[#allocation7 + $0x20] sm:$0xff]
    %v75 = vld [vmem:[#allocation7 + $0x28] sm:$0xff]
    %v76 = vld [vmem:[#allocation7 + $0x30] sm:$0xff]
    %v77 = vld [vmem:[#allocation7 + $0x38] sm:$0xff]
    %v78 = vld [vmem:[#allocation7 + $0x40] sm:$0xff]
    %v79 = vld [vmem:[#allocation7 + $0x48] sm:$0xff]
    %v80 = vld [vmem:[#allocation7 + $0x50] sm:$0xff]
    %v81 = vld [vmem:[#allocation7 + $0x58] sm:$0xff]
    %v82 = vld [vmem:[#allocation7 + $0x60] sm:$0xff]
    %v83 = vld [vmem:[#allocation7 + $0x68] sm:$0xff]
    %v84 = vld [vmem:[#allocation7 + $0x70] sm:$0xff]
    %v85 = vld [vmem:[#allocation7 + $0x78] sm:$0xff]
    %v86 = vld [vmem:[#allocation7 + $0x80] sm:$0xff]
    %v87 = vld [vmem:[#allocation7 + $0x88] sm:$0xff]
    %v88 = vld [vmem:[#allocation7 + $0x90] sm:$0xff]
    %v89 = vld [vmem:[#allocation7 + $0x98] sm:$0xff]
    %v90 = vld [vmem:[#allocation7 + $0xa0] sm:$0xff]
    %v91 = vld [vmem:[#allocation7 + $0xa8] sm:$0xff]
    %v92 = vld [vmem:[#allocation7 + $0xb0] sm:$0xff]
    %v93 = vld [vmem:[#allocation7 + $0xb8] sm:$0xff]
    %v94 = vld [vmem:[#allocation7 + $0xc0] sm:$0xff]
    %v95 = vld [vmem:[#allocation7 + $0xc8] sm:$0xff]
    %v96 = vld [vmem:[#allocation7 + $0xd0] sm:$0xff]
    %v97 = vld [vmem:[#allocation7 + $0xd8] sm:$0xff]
    %v98 = vld [vmem:[#allocation7 + $0xe0] sm:$0xff]
    %v99 = vld [vmem:[#allocation7 + $0xe8] sm:$0xff]
    %v100 = vld [vmem:[#allocation7 + $0xf0] sm:$0xff]
    %v101 = vld [vmem:[#allocation7 + $0xf8] sm:$0xff]
    %v102 = vld [vmem:[#allocation7 + $0x100] sm:$0xff]
    %v103 = vld [vmem:[#allocation7 + $0x108] sm:$0xff]
    %v104 = vld [vmem:[#allocation7 + $0x110] sm:$0xff]
    %v105 = vld [vmem:[#allocation7 + $0x118] sm:$0xff]
    %v106 = vld [vmem:[#allocation7 + $0x120] sm:$0xff]
    %v107 = vld [vmem:[#allocation7 + $0x128] sm:$0xff]
    %v108 = vld [vmem:[#allocation7 + $0x130] sm:$0xff]
    %v109 = vld [vmem:[#allocation7 + $0x138] sm:$0xff]
    %v110 = vld [vmem:[#allocation7 + $0x140] sm:$0xff]
    %v111 = vld [vmem:[#allocation7 + $0x148] sm:$0xff]
    %v112 = vld [vmem:[#allocation7 + $0x150] sm:$0xff]
    %v113 = vld [vmem:[#allocation7 + $0x158] sm:$0xff]
    %v114 = vld [vmem:[#allocation7 + $0x160] sm:$0xff]
    %v115 = vld [vmem:[#allocation7 + $0x168] sm:$0xff]
    %v116 = vld [vmem:[#allocation7 + $0x170] sm:$0xff]
    %v117 = vld [vmem:[#allocation7 + $0x178] sm:$0xff]
    %v118 = vld [vmem:[#allocation7 + $0x180] sm:$0xff]
    %v119 = vld [vmem:[#allocation7 + $0x188] sm:$0xff]
    %v120 = vld [vmem:[#allocation7 + $0x190] sm:$0xff]
    %v121 = vld [vmem:[#allocation7 + $0x198] sm:$0xff]
    %v122 = vld [vmem:[#allocation7 + $0x1a0] sm:$0xff]
    %v123 = vld [vmem:[#allocation7 + $0x1a8] sm:$0xff]
    %v124 = vld [vmem:[#allocation7 + $0x1b0] sm:$0xff]
    %v125 = vld [vmem:[#allocation7 + $0x1b8] sm:$0xff]
    %v126 = vld [vmem:[#allocation7 + $0x1c0] sm:$0xff]
    %v127 = vld [vmem:[#allocation7 + $0x1c8] sm:$0xff]
    %v128 = vld [vmem:[#allocation7 + $0x1d0] sm:$0xff]
    %v129 = vld [vmem:[#allocation7 + $0x1d8] sm:$0xff]
    %v130 = vld [vmem:[#allocation7 + $0x1e0] sm:$0xff]
    %v131 = vld [vmem:[#allocation7 + $0x1e8] sm:$0xff]
    %v132 = vld [vmem:[#allocation7 + $0x1f0] sm:$0xff]
    %v133 = vld [vmem:[#allocation7 + $0x1f8] sm:$0xff]
    %v134 = vld [vmem:[#allocation7 + $0x200] sm:$0xff]
    %v135 = vld [vmem:[#allocation7 + $0x208] sm:$0xff]
    %v136 = vld [vmem:[#allocation7 + $0x210] sm:$0xff]
    %v137 = vld [vmem:[#allocation7 + $0x218] sm:$0xff]
    %v138 = vld [vmem:[#allocation7 + $0x220] sm:$0xff]
    %v139 = vld [vmem:[#allocation7 + $0x228] sm:$0xff]
    %v140 = vld [vmem:[#allocation7 + $0x230] sm:$0xff]
    %v141 = vld [vmem:[#allocation7 + $0x238] sm:$0xff]
    %v142 = vld [vmem:[#allocation7 + $0x240] sm:$0xff]
    %v143 = vld [vmem:[#allocation7 + $0x248] sm:$0xff]
    %v144 = vld [vmem:[#allocation7 + $0x250] sm:$0xff]
    %v145 = vld [vmem:[#allocation7 + $0x258] sm:$0xff]
    %v146 = vld [vmem:[#allocation7 + $0x260] sm:$0xff]
    %v147 = vld [vmem:[#allocation7 + $0x268] sm:$0xff]
    %v148 = vld [vmem:[#allocation7 + $0x270] sm:$0xff]
    %v149 = vld [vmem:[#allocation7 + $0x278] sm:$0xff]
    %v150 = vld [vmem:[#allocation7 + $0x280] sm:$0xff]
    %v151 = vld [vmem:[#allocation7 + $0x288] sm:$0xff]
    %v152 = vld [vmem:[#allocation7 + $0x290] sm:$0xff]
    %v153 = vld [vmem:[#allocation7 + $0x298] sm:$0xff]
    %v154 = vld [vmem:[#allocation7 + $0x2a0] sm:$0xff]
    %v155 = vld [vmem:[#allocation7 + $0x2a8] sm:$0xff]
    %v156 = vld [vmem:[#allocation7 + $0x2b0] sm:$0xff]
    %v157 = vld [vmem:[#allocation7 + $0x2b8] sm:$0xff]
    %v158 = vld [vmem:[#allocation7 + $0x2c0] sm:$0xff]
    %v159 = vld [vmem:[#allocation7 + $0x2c8] sm:$0xff]
    %v160 = vld [vmem:[#allocation7 + $0x2d0] sm:$0xff]
    %v161 = vld [vmem:[#allocation7 + $0x2d8] sm:$0xff]
    %v162 = vld [vmem:[#allocation7 + $0x2e0] sm:$0xff]
    %v163 = vld [vmem:[#allocation7 + $0x2e8] sm:$0xff]
    %v164 = vld [vmem:[#allocation7 + $0x2f0] sm:$0xff]
    %v165 = vld [vmem:[#allocation7 + $0x2f8] sm:$0xff]
    %v166 = vld [vmem:[#allocation7 + $0x300] sm:$0xff]
    %v167 = vld [vmem:[#allocation7 + $0x308] sm:$0xff]
    %v168 = vld [vmem:[#allocation7 + $0x310] sm:$0xff]
    %v169 = vld [vmem:[#allocation7 + $0x318] sm:$0xff]
    %v170 = vld [vmem:[#allocation7 + $0x320] sm:$0xff]
    %v171 = vld [vmem:[#allocation7 + $0x328] sm:$0xff]
    %v172 = vld [vmem:[#allocation7 + $0x330] sm:$0xff]
    %v173 = vld [vmem:[#allocation7 + $0x338] sm:$0xff]
    %v174 = vld [vmem:[#allocation7 + $0x340] sm:$0xff]
    %v175 = vld [vmem:[#allocation7 + $0x348] sm:$0xff]
    %v176 = vld [vmem:[#allocation7 + $0x350] sm:$0xff]
    %v177 = vld [vmem:[#allocation7 + $0x358] sm:$0xff]
    %v178 = vld [vmem:[#allocation7 + $0x360] sm:$0xff]
    %v179 = vld [vmem:[#allocation7 + $0x368] sm:$0xff]
    %v180 = vld [vmem:[#allocation7 + $0x370] sm:$0xff]
    %v181 = vld [vmem:[#allocation7 + $0x378] sm:$0xff]
    %v182 = vld [vmem:[#allocation7 + $0x380] sm:$0xff]
    %v183 = vld [vmem:[#allocation7 + $0x388] sm:$0xff]
    %v184 = vld [vmem:[#allocation7 + $0x390] sm:$0xff]
    %v185 = vld [vmem:[#allocation7 + $0x398] sm:$0xff]
    %v186 = vld [vmem:[#allocation7 + $0x3a0] sm:$0xff]
    %v187 = vld [vmem:[#allocation7 + $0x3a8] sm:$0xff]
    %v188 = vld [vmem:[#allocation7 + $0x3b0] sm:$0xff]
    %v189 = vld [vmem:[#allocation7 + $0x3b8] sm:$0xff]
    %v190 = vld [vmem:[#allocation7 + $0x3c0] sm:$0xff]
    %v191 = vld [vmem:[#allocation7 + $0x3c8] sm:$0xff]
    %v192 = vld [vmem:[#allocation7 + $0x3d0] sm:$0xff]
    %v193 = vld [vmem:[#allocation7 + $0x3d8] sm:$0xff]
    %v194 = vld [vmem:[#allocation7 + $0x3e0] sm:$0xff]
    %v195 = vld [vmem:[#allocation7 + $0x3e8] sm:$0xff]
    %v196 = vld [vmem:[#allocation7 + $0x3f0] sm:$0xff]
    %v197 = vld [vmem:[#allocation7 + $0x3f8] sm:$0xff]
    %v198 = vld [vmem:[%s3] sm:$0x1]
    %v200 = vlaneseq
    %v201 = vshrl.u32 %v200, 7
    %v202 = vsub.s32 0, %v201
    %v203 = vrot.slane %v198, %v202
    %205 = vmatprep.subr.mxu0 0.0
    %206 = vmatpush1.msra.mxu0 %v70
    %207 = vmatprep.subr.mxu0 0.0
    %208 = vmatpush1.msra.mxu0 %v71
    %209 = vmatprep.subr.mxu0 0.0
    %210 = vmatpush1.msra.mxu0 %v72
    %211 = vmatprep.subr.mxu0 0.0
    %212 = vmatpush1.msra.mxu0 %v73
    %213 = vmatprep.subr.mxu0 0.0
    %214 = vmatpush1.msra.mxu0 %v74
    %215 = vmatprep.subr.mxu0 0.0
    %216 = vmatpush1.msra.mxu0 %v75
    %217 = vmatprep.subr.mxu0 0.0
    %218 = vmatpush1.msra.mxu0 %v76
    %219 = vmatprep.subr.mxu0 0.0
    %220 = vmatpush1.msra.mxu0 %v77
    %221 = vmatprep.subr.mxu0 0.0
    %222 = vmatpush1.msra.mxu0 %v78
    %223 = vmatprep.subr.mxu0 0.0
    %224 = vmatpush1.msra.mxu0 %v79
    %225 = vmatprep.subr.mxu0 0.0
    %226 = vmatpush1.msra.mxu0 %v80
    %227 = vmatprep.subr.mxu0 0.0
    %228 = vmatpush1.msra.mxu0 %v81
    %229 = vmatprep.subr.mxu0 0.0
    %230 = vmatpush1.msra.mxu0 %v82
    %231 = vmatprep.subr.mxu0 0.0
    %232 = vmatpush1.msra.mxu0 %v83
    %233 = vmatprep.subr.mxu0 0.0
    %234 = vmatpush1.msra.mxu0 %v84
    %235 = vmatprep.subr.mxu0 0.0
    %236 = vmatpush1.msra.mxu0 %v85
    %237 = vmatprep.subr.mxu0 0.0
    %238 = vmatpush1.msra.mxu0 %v86
    %239 = vmatprep.subr.mxu0 0.0
    %240 = vmatpush1.msra.mxu0 %v87
    %241 = vmatprep.subr.mxu0 0.0
    %242 = vmatpush1.msra.mxu0 %v88
    %243 = vmatprep.subr.mxu0 0.0
    %244 = vmatpush1.msra.mxu0 %v89
    %245 = vmatprep.subr.mxu0 0.0
    %246 = vmatpush1.msra.mxu0 %v90
    %247 = vmatprep.subr.mxu0 0.0
    %248 = vmatpush1.msra.mxu0 %v91
    %249 = vmatprep.subr.mxu0 0.0
    %250 = vmatpush1.msra.mxu0 %v92
    %251 = vmatprep.subr.mxu0 0.0
    %252 = vmatpush1.msra.mxu0 %v93
    %253 = vmatprep.subr.mxu0 0.0
    %254 = vmatpush1.msra.mxu0 %v94
    %255 = vmatprep.subr.mxu0 0.0
    %256 = vmatpush1.msra.mxu0 %v95
    %257 = vmatprep.subr.mxu0 0.0
    %258 = vmatpush1.msra.mxu0 %v96
    %259 = vmatprep.subr.mxu0 0.0
    %260 = vmatpush1.msra.mxu0 %v97
    %261 = vmatprep.subr.mxu0 0.0
    %262 = vmatpush1.msra.mxu0 %v98
    %263 = vmatprep.subr.mxu0 0.0
    %264 = vmatpush1.msra.mxu0 %v99
    %265 = vmatprep.subr.mxu0 0.0
    %266 = vmatpush1.msra.mxu0 %v100
    %267 = vmatprep.subr.mxu0 0.0
    %268 = vmatpush1.msra.mxu0 %v101
    %269 = vmatprep.mubr.f32.mxu0 %v63
    %270 = vmatmul.mubr.f32.gmra.mrb[0].mxu0 %v62
    %v271 = vpop.f32.mrb[0].mxu0
    %v272 = vadd.f32 %v203, %v271
    %v273 = vpop.f32.mrb[0].mxu0
    %274 = vdwg.mxu0
    %275 = vmatprep.subr.mxu0 0.0
    %276 = vmatpush1.msra.mxu0 %v102
    %277 = vmatprep.subr.mxu0 0.0
    %278 = vmatpush1.msra.mxu0 %v103
    %279 = vmatprep.subr.mxu0 0.0
    %280 = vmatpush1.msra.mxu0 %v104
    %281 = vmatprep.subr.mxu0 0.0
    %282 = vmatpush1.msra.mxu0 %v105
    %283 = vmatprep.subr.mxu0 0.0
    %284 = vmatpush1.msra.mxu0 %v106
    %285 = vmatprep.subr.mxu0 0.0
    %286 = vmatpush1.msra.mxu0 %v107
    %287 = vmatprep.subr.mxu0 0.0
    %288 = vmatpush1.msra.mxu0 %v108
    %289 = vmatprep.subr.mxu0 0.0
    %290 = vmatpush1.msra.mxu0 %v109
    %291 = vmatprep.subr.mxu0 0.0
    %292 = vmatpush1.msra.mxu0 %v110
    %293 = vmatprep.subr.mxu0 0.0
    %294 = vmatpush1.msra.mxu0 %v111
    %295 = vmatprep.subr.mxu0 0.0
    %296 = vmatpush1.msra.mxu0 %v112
    %297 = vmatprep.subr.mxu0 0.0
    %298 = vmatpush1.msra.mxu0 %v113
    %299 = vmatprep.subr.mxu0 0.0
    %300 = vmatpush1.msra.mxu0 %v114
    %301 = vmatprep.subr.mxu0 0.0
    %302 = vmatpush1.msra.mxu0 %v115
    %303 = vmatprep.subr.mxu0 0.0
    %304 = vmatpush1.msra.mxu0 %v116
    %305 = vmatprep.subr.mxu0 0.0
    %306 = vmatpush1.msra.mxu0 %v117
    %307 = vmatprep.subr.mxu0 0.0
    %308 = vmatpush1.msra.mxu0 %v118
    %309 = vmatprep.subr.mxu0 0.0
    %310 = vmatpush1.msra.mxu0 %v119
    %311 = vmatprep.subr.mxu0 0.0
    %312 = vmatpush1.msra.mxu0 %v120
    %313 = vmatprep.subr.mxu0 0.0
    %314 = vmatpush1.msra.mxu0 %v121
    %315 = vmatprep.subr.mxu0 0.0
    %316 = vmatpush1.msra.mxu0 %v122
    %317 = vmatprep.subr.mxu0 0.0
    %318 = vmatpush1.msra.mxu0 %v123
    %319 = vmatprep.subr.mxu0 0.0
    %320 = vmatpush1.msra.mxu0 %v124
    %321 = vmatprep.subr.mxu0 0.0
    %322 = vmatpush1.msra.mxu0 %v125
    %323 = vmatprep.subr.mxu0 0.0
    %324 = vmatpush1.msra.mxu0 %v126
    %325 = vmatprep.subr.mxu0 0.0
    %326 = vmatpush1.msra.mxu0 %v127
    %327 = vmatprep.subr.mxu0 0.0
    %328 = vmatpush1.msra.mxu0 %v128
    %329 = vmatprep.subr.mxu0 0.0
    %330 = vmatpush1.msra.mxu0 %v129
    %331 = vmatprep.subr.mxu0 0.0
    %332 = vmatpush1.msra.mxu0 %v130
    %333 = vmatprep.subr.mxu0 0.0
    %334 = vmatpush1.msra.mxu0 %v131
    %335 = vmatprep.subr.mxu0 0.0
    %336 = vmatpush1.msra.mxu0 %v132
    %337 = vmatprep.subr.mxu0 0.0
    %338 = vmatpush1.msra.mxu0 %v133
    %339 = vmatprep.mubr.f32.mxu0 %v65
    %340 = vmatmul.mubr.f32.gmra.mrb[0].mxu0 %v64
    %v341 = vpop.f32.mrb[0].mxu0
    %v342 = vadd.f32 %v272, %v341
    %v343 = vpop.f32.mrb[0].mxu0
    %344 = vdwg.mxu0
    %345 = vmatprep.subr.mxu0 0.0
    %346 = vmatpush1.msra.mxu0 %v134
    %347 = vmatprep.subr.mxu0 0.0
    %348 = vmatpush1.msra.mxu0 %v135
    %349 = vmatprep.subr.mxu0 0.0
    %350 = vmatpush1.msra.mxu0 %v136
    %351 = vmatprep.subr.mxu0 0.0
    %352 = vmatpush1.msra.mxu0 %v137
    %353 = vmatprep.subr.mxu0 0.0
    %354 = vmatpush1.msra.mxu0 %v138
    %355 = vmatprep.subr.mxu0 0.0
    %356 = vmatpush1.msra.mxu0 %v139
    %357 = vmatprep.subr.mxu0 0.0
    %358 = vmatpush1.msra.mxu0 %v140
    %359 = vmatprep.subr.mxu0 0.0
    %360 = vmatpush1.msra.mxu0 %v141
    %361 = vmatprep.subr.mxu0 0.0
    %362 = vmatpush1.msra.mxu0 %v142
    %363 = vmatprep.subr.mxu0 0.0
    %364 = vmatpush1.msra.mxu0 %v143
    %365 = vmatprep.subr.mxu0 0.0
    %366 = vmatpush1.msra.mxu0 %v144
    %367 = vmatprep.subr.mxu0 0.0
    %368 = vmatpush1.msra.mxu0 %v145
    %369 = vmatprep.subr.mxu0 0.0
    %370 = vmatpush1.msra.mxu0 %v146
    %371 = vmatprep.subr.mxu0 0.0
    %372 = vmatpush1.msra.mxu0 %v147
    %373 = vmatprep.subr.mxu0 0.0
    %374 = vmatpush1.msra.mxu0 %v148
    %375 = vmatprep.subr.mxu0 0.0
    %376 = vmatpush1.msra.mxu0 %v149
    %377 = vmatprep.subr.mxu0 0.0
    %378 = vmatpush1.msra.mxu0 %v150
    %379 = vmatprep.subr.mxu0 0.0
    %380 = vmatpush1.msra.mxu0 %v151
    %381 = vmatprep.subr.mxu0 0.0
    %382 = vmatpush1.msra.mxu0 %v152
    %383 = vmatprep.subr.mxu0 0.0
    %384 = vmatpush1.msra.mxu0 %v153
    %385 = vmatprep.subr.mxu0 0.0
    %386 = vmatpush1.msra.mxu0 %v154
    %387 = vmatprep.subr.mxu0 0.0
    %388 = vmatpush1.msra.mxu0 %v155
    %389 = vmatprep.subr.mxu0 0.0
    %390 = vmatpush1.msra.mxu0 %v156
    %391 = vmatprep.subr.mxu0 0.0
    %392 = vmatpush1.msra.mxu0 %v157
    %393 = vmatprep.subr.mxu0 0.0
    %394 = vmatpush1.msra.mxu0 %v158
    %395 = vmatprep.subr.mxu0 0.0
    %396 = vmatpush1.msra.mxu0 %v159
    %397 = vmatprep.subr.mxu0 0.0
    %398 = vmatpush1.msra.mxu0 %v160
    %399 = vmatprep.subr.mxu0 0.0
    %400 = vmatpush1.msra.mxu0 %v161
    %401 = vmatprep.subr.mxu0 0.0
    %402 = vmatpush1.msra.mxu0 %v162
    %403 = vmatprep.subr.mxu0 0.0
    %404 = vmatpush1.msra.mxu0 %v163
    %405 = vmatprep.subr.mxu0 0.0
    %406 = vmatpush1.msra.mxu0 %v164
    %407 = vmatprep.subr.mxu0 0.0
    %408 = vmatpush1.msra.mxu0 %v165
    %409 = vmatprep.mubr.f32.mxu0 %v67
    %410 = vmatmul.mubr.f32.gmra.mrb[0].mxu0 %v66
    %v411 = vpop.f32.mrb[0].mxu0
    %v412 = vadd.f32 %v342, %v411
    %v413 = vpop.f32.mrb[0].mxu0
    %414 = vdwg.mxu0
    %415 = vmatprep.subr.mxu0 0.0
    %416 = vmatpush1.msra.mxu0 %v166
    %417 = vmatprep.subr.mxu0 0.0
    %418 = vmatpush1.msra.mxu0 %v167
    %419 = vmatprep.subr.mxu0 0.0
    %420 = vmatpush1.msra.mxu0 %v168
    %421 = vmatprep.subr.mxu0 0.0
    %422 = vmatpush1.msra.mxu0 %v169
    %423 = vmatprep.subr.mxu0 0.0
    %424 = vmatpush1.msra.mxu0 %v170
    %425 = vmatprep.subr.mxu0 0.0
    %426 = vmatpush1.msra.mxu0 %v171
    %427 = vmatprep.subr.mxu0 0.0
    %428 = vmatpush1.msra.mxu0 %v172
    %429 = vmatprep.subr.mxu0 0.0
    %430 = vmatpush1.msra.mxu0 %v173
    %431 = vmatprep.subr.mxu0 0.0
    %432 = vmatpush1.msra.mxu0 %v174
    %433 = vmatprep.subr.mxu0 0.0
    %434 = vmatpush1.msra.mxu0 %v175
    %435 = vmatprep.subr.mxu0 0.0
    %436 = vmatpush1.msra.mxu0 %v176
    %437 = vmatprep.subr.mxu0 0.0
    %438 = vmatpush1.msra.mxu0 %v177
    %439 = vmatprep.subr.mxu0 0.0
    %440 = vmatpush1.msra.mxu0 %v178
    %441 = vmatprep.subr.mxu0 0.0
    %442 = vmatpush1.msra.mxu0 %v179
    %443 = vmatprep.subr.mxu0 0.0
    %444 = vmatpush1.msra.mxu0 %v180
    %445 = vmatprep.subr.mxu0 0.0
    %446 = vmatpush1.msra.mxu0 %v181
    %447 = vmatprep.subr.mxu0 0.0
    %448 = vmatpush1.msra.mxu0 %v182
    %449 = vmatprep.subr.mxu0 0.0
    %450 = vmatpush1.msra.mxu0 %v183
    %451 = vmatprep.subr.mxu0 0.0
    %452 = vmatpush1.msra.mxu0 %v184
    %453 = vmatprep.subr.mxu0 0.0
    %454 = vmatpush1.msra.mxu0 %v185
    %455 = vmatprep.subr.mxu0 0.0
    %456 = vmatpush1.msra.mxu0 %v186
    %457 = vmatprep.subr.mxu0 0.0
    %458 = vmatpush1.msra.mxu0 %v187
    %459 = vmatprep.subr.mxu0 0.0
    %460 = vmatpush1.msra.mxu0 %v188
    %461 = vmatprep.subr.mxu0 0.0
    %462 = vmatpush1.msra.mxu0 %v189
    %463 = vmatprep.subr.mxu0 0.0
    %464 = vmatpush1.msra.mxu0 %v190
    %465 = vmatprep.subr.mxu0 0.0
    %466 = vmatpush1.msra.mxu0 %v191
    %467 = vmatprep.subr.mxu0 0.0
    %468 = vmatpush1.msra.mxu0 %v192
    %469 = vmatprep.subr.mxu0 0.0
    %470 = vmatpush1.msra.mxu0 %v193
    %471 = vmatprep.subr.mxu0 0.0
    %472 = vmatpush1.msra.mxu0 %v194
    %473 = vmatprep.subr.mxu0 0.0
    %474 = vmatpush1.msra.mxu0 %v195
    %475 = vmatprep.subr.mxu0 0.0
    %476 = vmatpush1.msra.mxu0 %v196
    %477 = vmatprep.subr.mxu0 0.0
    %478 = vmatpush1.msra.mxu0 %v197
    %479 = vmatprep.mubr.f32.mxu0 %v69
    %480 = vmatmul.mubr.f32.gmra.mrb[0].mxu0 %v68
    %v481 = vpop.f32.mrb[0].mxu0
    %v482 = vadd.f32 %v412, %v481
    %v483 = vpop.f32.mrb[0].mxu0
    %484 = vdwg.mxu0
    %v485 = vmax.f32 %v482, 0.0
    %v486 = vld [vmem:[#allocation9] sm:$0xff]
    %v487 = vld [vmem:[#allocation9 + $0x8] sm:$0xff]
    %v488 = vld [vmem:[#allocation9 + $0x10] sm:$0xff]
    %v489 = vld [vmem:[#allocation9 + $0x18] sm:$0xff]
    %v490 = vld [vmem:[#allocation9 + $0x20] sm:$0xff]
    %v491 = vld [vmem:[#allocation9 + $0x28] sm:$0xff]
    %v492 = vld [vmem:[#allocation9 + $0x30] sm:$0xff]
    %v493 = vld [vmem:[#allocation9 + $0x38] sm:$0xff]
    %v494 = vld [vmem:[#allocation9 + $0x40] sm:$0xff]
    %v495 = vld [vmem:[#allocation9 + $0x48] sm:$0xff]
    %v496 = vld [vmem:[#allocation9 + $0x50] sm:$0xff]
    %v497 = vld [vmem:[#allocation9 + $0x58] sm:$0xff]
    %v498 = vld [vmem:[#allocation9 + $0x60] sm:$0xff]
    %v499 = vld [vmem:[#allocation9 + $0x68] sm:$0xff]
    %v500 = vld [vmem:[#allocation9 + $0x70] sm:$0xff]
    %v501 = vld [vmem:[#allocation9 + $0x78] sm:$0xff]
    %v502 = vld [vmem:[%s5] sm:$0x1]
    %v504 = vlaneseq
    %v505 = vshrl.u32 %v504, 7
    %v506 = vsub.s32 0, %v505
    %v507 = vrot.slane %v502, %v506
    %509 = vmatprep.subr.mxu0 0.0
    %510 = vmatpush1.msra.mxu0 %v486
    %511 = vmatprep.subr.mxu0 0.0
    %512 = vmatpush1.msra.mxu0 %v487
    %513 = vmatprep.subr.mxu0 0.0
    %514 = vmatpush1.msra.mxu0 %v488
    %515 = vmatprep.subr.mxu0 0.0
    %516 = vmatpush1.msra.mxu0 %v489
    %517 = vmatprep.subr.mxu0 0.0
    %518 = vmatpush1.msra.mxu0 %v490
    %519 = vmatprep.subr.mxu0 0.0
    %520 = vmatpush1.msra.mxu0 %v491
    %521 = vmatprep.subr.mxu0 0.0
    %522 = vmatpush1.msra.mxu0 %v492
    %523 = vmatprep.subr.mxu0 0.0
    %524 = vmatpush1.msra.mxu0 %v493
    %525 = vmatprep.subr.mxu0 0.0
    %526 = vmatpush1.msra.mxu0 %v494
    %527 = vmatprep.subr.mxu0 0.0
    %528 = vmatpush1.msra.mxu0 %v495
    %529 = vmatprep.subr.mxu0 0.0
    %530 = vmatpush1.msra.mxu0 %v496
    %531 = vmatprep.subr.mxu0 0.0
    %532 = vmatpush1.msra.mxu0 %v497
    %533 = vmatprep.subr.mxu0 0.0
    %534 = vmatpush1.msra.mxu0 %v498
    %535 = vmatprep.subr.mxu0 0.0
    %536 = vmatpush1.msra.mxu0 %v499
    %537 = vmatprep.subr.mxu0 0.0
    %538 = vmatpush1.msra.mxu0 %v500
    %539 = vmatprep.subr.mxu0 0.0
    %540 = vmatpush1.msra.mxu0 %v501
    %541 = vmatprep.subr.mxu0 0.0
    %542 = vmatpush1.msra.mxu0 0.0
    %543 = vmatprep.subr.mxu0 0.0
    %544 = vmatpush1.msra.mxu0 0.0
    %545 = vmatprep.subr.mxu0 0.0
    %546 = vmatpush1.msra.mxu0 0.0
    %547 = vmatprep.subr.mxu0 0.0
    %548 = vmatpush1.msra.mxu0 0.0
    %549 = vmatprep.subr.mxu0 0.0
    %550 = vmatpush1.msra.mxu0 0.0
    %551 = vmatprep.subr.mxu0 0.0
    %552 = vmatpush1.msra.mxu0 0.0
    %553 = vmatprep.subr.mxu0 0.0
    %554 = vmatpush1.msra.mxu0 0.0
    %555 = vmatprep.subr.mxu0 0.0
    %556 = vmatpush1.msra.mxu0 0.0
    %557 = vmatprep.subr.mxu0 0.0
    %558 = vmatpush1.msra.mxu0 0.0
    %559 = vmatprep.subr.mxu0 0.0
    %560 = vmatpush1.msra.mxu0 0.0
    %561 = vmatprep.subr.mxu0 0.0
    %562 = vmatpush1.msra.mxu0 0.0
    %563 = vmatprep.subr.mxu0 0.0
    %564 = vmatpush1.msra.mxu0 0.0
    %565 = vmatprep.subr.mxu0 0.0
    %566 = vmatpush1.msra.mxu0 0.0
    %567 = vmatprep.subr.mxu0 0.0
    %568 = vmatpush1.msra.mxu0 0.0
    %569 = vmatprep.subr.mxu0 0.0
    %570 = vmatpush1.msra.mxu0 0.0
    %571 = vmatprep.subr.mxu0 0.0
    %572 = vmatpush1.msra.mxu0 0.0
    %573 = vmatprep.mubr.f32.mxu0 0.0
    %574 = vmatmul.mubr.f32.gmra.mrb[0].mxu0 %v485
    %v575 = vpop.f32.mrb[0].mxu0
    %v576 = vadd.f32 %v507, %v575
    %v577 = vpop.f32.mrb[0].mxu0
    %578 = vdwg.mxu0
    %579 = vst [vmem:[#allocation10] sm:$0xff] %v576
    // Predicated region
    $region34: #{tpu_custom_call.1} parent=1 // pred_check
      _
    $region35: #{tpu_custom_call.1} parent=1 // pred_check_branch
      %581 = sbr.rel (0) target = $region37
    $region36: #{tpu_custom_call.1} parent=1 // pred_region
      %s583 = ssub.s32 128, 128
      %584 = vsyncadd [#allocation6], %s583
      %s586 = sshll.u32 [#allocation10], 4
      %s587 = int_to_ptr.vmem [resolvable:$true] %s586
      %589 = dma.vmem_to_hbm [thread:$0]  %s587, 128, %s6, [#allocation6]
    $region37: #{tpu_custom_call.1} parent=1 // pred_fallthru
      _
    // Predicated region
    $region38: #{tpu_custom_call.1} parent=1 // pred_check
      _
    $region39: #{tpu_custom_call.1} parent=1 // pred_check_branch
      %591 = sbr.rel (0) target = $region41
    $region40: #{tpu_custom_call.1} parent=1 // pred_region
      %592 = dma.done [#allocation6], 128
    $region41: #{tpu_custom_call.1} parent=1 // pred_fallthru
      _
    %593 = vsyncpa [#allocation5], 1
    %594 = vsyncpa [#allocation8], 1
    %595 = vsyncpa [#allocation6], 1

</llo_original>
